<compile_context>
chip_gen: v7x
topology: tpu7x:2x2x1
jax: 0.10.0
libtpu: 0.0.40
codegen_flags: <defaults>
</compile_context>

<pallas_src>
import math

import jax
import jax.numpy as jnp
from jax.experimental import pallas as pl
from jax.experimental.pallas import tpu as pltpu  # noqa: F401  (TPU backend assumed)


def _copy_kernel(x_ref, o_ref):
    # Pure identity copy of the (already flattened) block.
    o_ref[...] = x_ref[...]


# Conservative single-block budget (input block + output block) that is safe on
# every generation, including v7x's smaller 64 MiB physical / 32 MiB scoped VMEM.
_SINGLE_BLOCK_BUDGET_BYTES = 8 * 1024 * 1024


def flatten_pallas(x):
    """torch.nn.Flatten(start_dim=1) semantics: (N, ...) -> (N, prod(...))."""
    n = x.shape[0]
    d = math.prod(x.shape[1:]) if len(x.shape) > 1 else 1
    # Metadata-only row-major flatten (exactly what torch.nn.Flatten produces).
    x2 = x.reshape(n, d)
    nbytes = n * d * jnp.dtype(x.dtype).itemsize

    if 2 * nbytes <= _SINGLE_BLOCK_BUDGET_BYTES:
        # Whole tensor as ONE block: no grid, no tiling, full-array blocks are
        # exempt from the (8,128) constraint, stores are lane-dense/unmasked.
        return pl.pallas_call(
            _copy_kernel,
            out_shape=jax.ShapeDtypeStruct((n, d), x.dtype),
            in_specs=[pl.BlockSpec((n, d), lambda: (0, 0))],
            out_specs=pl.BlockSpec((n, d), lambda: (0, 0)),
            # Pure copy: let the output reuse the (donatable) input buffer.
            input_output_aliases={0: 0},
        )(x2)

    # Fallback for very large tensors: wide lane-dense tiles (multiple of 128),
    # batch dim kept as the full array dim (exempt from the sublane rule).
    tile_d = 2048
    grid = (pl.cdiv(d, tile_d),)
    return pl.pallas_call(
        _copy_kernel,
        out_shape=jax.ShapeDtypeStruct((n, d), x.dtype),
        grid=grid,
        in_specs=[pl.BlockSpec((n, tile_d), lambda j: (0, j))],
        out_specs=pl.BlockSpec((n, tile_d), lambda j: (0, j)),
        input_output_aliases={0: 0},
    )(x2)


class Net:
    """JAX/Pallas port of the PyTorch Net: forward(x) = Flatten()(x). No params."""

    def __call__(self, x):
        # NOTE: the zero-cost implementation is simply `x.reshape(x.shape[0], -1)`;
        # the Pallas path below materializes that view with minimal overhead.
        return flatten_pallas(x)


if __name__ == "__main__":
    key = jax.random.PRNGKey(0)
    x = jax.random.normal(key, (2, 4, 16, 16), dtype=jnp.float32)  # NCHW input

    net = Net()
    y = jax.block_until_ready(net(x))

    assert y.shape == (2, 4 * 16 * 16), y.shape
    assert y.dtype == x.dtype
    # Reference: torch.nn.Flatten(start_dim=1) == row-major reshape.
    ref = x.reshape(2, -1)
    assert jnp.array_equal(y, ref)

    print("KERNEL_OK")
</pallas_src>

<mosaic_0001>
module attributes {stable_mosaic.version = 11 : i64} {
  func.func @_copy_kernel(%arg0: memref<2x1024xf32, #tpu.memory_space<vmem>>, %arg1: memref<2x1024xf32, #tpu.memory_space<vmem>>) attributes {dimension_semantics = [], scalar_prefetch = 0 : i64, scratch_operands = 0 : i64, tpu.core_type = #tpu.core_type<tc>} {
    %c0 = arith.constant 0 : index
    %c0_0 = arith.constant 0 : index
    %0 = vector.load %arg0[%c0, %c0_0] : memref<2x1024xf32, #tpu.memory_space<vmem>>, vector<2x1024xf32>
    %c0_1 = arith.constant 0 : index
    %c0_2 = arith.constant 0 : index
    %1 = vector.load %arg1[%c0_1, %c0_2] : memref<2x1024xf32, #tpu.memory_space<vmem>>, vector<2x1024xf32>
    tpu.vector_store %arg1[%c0_1, %c0_2], %0 {strides = array<i32>} : memref<2x1024xf32, #tpu.memory_space<vmem>>, vector<2x1024xf32>,
    return
  }
}

</mosaic_0001>

<llo_original>
// kernel: tpu_custom_call.1
$region0: #{tpu_custom_call.1}
  #allocation0 [shape = 'u32[]', space=smem, size = 0x4, offset = 0x4, fixed_abs, tag = 'smem constant byte address 0x4 - core index']
  #allocation1 [shape = 'u32[144,128]{1,0:T(1,128)}', space=vmem, size = 0x12000, scoped, tag = 'internal scratch']
  %s0 = inlined_call_operand.hbm [shape: f32[2,1024], index: 0, kind: input, shape index: {}, may-alias: {0,1}]
  %s1 = inlined_call_operand.hbm [shape: f32[2,1024], index: 1, kind: output, shape index: {}, may-alias: {0,1}]
  %s2 = sld [smem:[#allocation0]]
  $region18: #{tpu_custom_call.1} parent=0
    _
  %s4 = ssub.s32 1, %s2
  %s5 = scalar_select 0, %s4, %s2
  $region1: #{tpu_custom_call.1} parent=0
    #allocation2 [shape = 'u8[8192]{0}', space=vmem, size = 0x2000, scoped, tag = 'input window, operand 0, single buffered']
    #allocation3 [shape = 's32[1]{0}', space=sflag, size = 0x4, scoped, tag = 'scoped memory for tpu_custom_call.1']
    #allocation4 [shape = 's32[1]{0}', space=sflag, size = 0x4, scoped, tag = 'scoped memory for tpu_custom_call.1']
    #allocation5 [shape = 'u8[8192]{0}', space=vmem, size = 0x2000, scoped, tag = 'output window, operand 0, single buffered']
    %6 = vsyncpa [#allocation3], 0
    %7 = vsyncpa [#allocation4], 0
    // Predicated region
    $region2: #{tpu_custom_call.1} parent=1 // pred_check
      _
    $region3: #{tpu_custom_call.1} parent=1 // pred_check_branch
      %9 = sbr.rel (0) target = $region5
    $region4: #{tpu_custom_call.1} parent=1 // pred_region
      %s11 = ssub.s32 256, 256
      %12 = vsyncadd [#allocation3], %s11
      %s14 = sshll.u32 [#allocation2], 4
      %s15 = int_to_ptr.vmem [resolvable:$true] %s14
      %17 = dma.hbm_to_vmem [thread:$0]  %s0, 256, %s15, [#allocation3]
    $region5: #{tpu_custom_call.1} parent=1 // pred_fallthru
      _
    // Predicated region
    $region6: #{tpu_custom_call.1} parent=1 // pred_check
      _
    $region7: #{tpu_custom_call.1} parent=1 // pred_check_branch
      %19 = sbr.rel (0) target = $region9
    $region8: #{tpu_custom_call.1} parent=1 // pred_region
      %20 = dma.done [#allocation3], 256
    $region9: #{tpu_custom_call.1} parent=1 // pred_fallthru
      _
    %v21 = vld [vmem:[#allocation2] sm:$0xff]
    %v22 = vld [vmem:[#allocation2 + $0x8] sm:$0xff]
    %23 = vst [vmem:[#allocation5] sm:$0xff] %v21
    %24 = vst [vmem:[#allocation5 + $0x8] sm:$0xff] %v22
    // Predicated region
    $region10: #{tpu_custom_call.1} parent=1 // pred_check
      _
    $region11: #{tpu_custom_call.1} parent=1 // pred_check_branch
      %26 = sbr.rel (0) target = $region13
    $region12: #{tpu_custom_call.1} parent=1 // pred_region
      %s28 = ssub.s32 256, 256
      %29 = vsyncadd [#allocation4], %s28
      %s31 = sshll.u32 [#allocation5], 4
      %s32 = int_to_ptr.vmem [resolvable:$true] %s31
      %34 = dma.vmem_to_hbm [thread:$0]  %s32, 256, %s1, [#allocation4]
    $region13: #{tpu_custom_call.1} parent=1 // pred_fallthru
      _
    // Predicated region
    $region14: #{tpu_custom_call.1} parent=1 // pred_check
      _
    $region15: #{tpu_custom_call.1} parent=1 // pred_check_branch
      %36 = sbr.rel (0) target = $region17
    $region16: #{tpu_custom_call.1} parent=1 // pred_region
      %37 = dma.done [#allocation4], 256
    $region17: #{tpu_custom_call.1} parent=1 // pred_fallthru
      _
    %38 = vsyncpa [#allocation3], 1
    %39 = vsyncpa [#allocation4], 1

</llo_original>
